<compile_context>
chip_gen: v5e
topology: v5e:2x2
jax: 0.10.0
libtpu: 0.0.40
codegen_flags: <defaults>
</compile_context>

<pallas_src>
import math
import functools

import jax
import jax.numpy as jnp
from jax.experimental import pallas as pl
from jax.experimental.pallas import tpu as pltpu


def _attention_kernel(hid_ref, ctx_ref,
                      wq_ref, bq_ref, wk_ref, bk_ref, wv_ref, bv_ref,
                      out_ref, *, batch_block, n_q, n_kv, num_heads, head_dim,
                      mxu_dtype):
    # hid_ref: (BB*N, h1)   ctx_ref: (BB*M, h2)
    # wq_ref:  (h1, H*D)    bq_ref:  (1, H*D)   (same for k/v; 1/sqrt(D) already
    #                                            folded into wq/bq by the wrapper)
    # out_ref: (BB*N, H*D)
    BB, N, M, H, D = batch_block, n_q, n_kv, num_heads, head_dim

    x = hid_ref[...].astype(mxu_dtype)    # (BB*N, h1)
    c = ctx_ref[...].astype(mxu_dtype)    # (BB*M, h2)

    # Fused-head projections: one wide, lane-dense MXU matmul each
    # (bf16 operands, f32 accumulation); biases added in f32.
    q = jnp.dot(x, wq_ref[...], preferred_element_type=jnp.float32) + bq_ref[...]  # (BB*N, H*D)
    k = jnp.dot(c, wk_ref[...], preferred_element_type=jnp.float32) + bk_ref[...]  # (BB*M, H*D)
    v = jnp.dot(c, wv_ref[...], preferred_element_type=jnp.float32) + bv_ref[...]  # (BB*M, H*D)

    # Single head-major relayout to (G, rows, D), G = BB*H, so attention runs as
    # two batched einsums over ALL heads at once (no per-head matmul loop).
    def to_heads(t, rows):
        parts = []
        for b in range(BB):
            for h in range(H):
                parts.append(t[b * rows:(b + 1) * rows, h * D:(h + 1) * D])
        return jnp.stack(parts, axis=0).astype(mxu_dtype)     # (BB*H, rows, D)

    qh = to_heads(q, N)          # (G, N, D)
    kh = to_heads(k, M)          # (G, M, D)
    vh = to_heads(v, M)          # (G, M, D)

    # Scores are already pre-scaled via the folded 1/sqrt(D) in Wq/bq.
    scores = jnp.einsum('gnd,gmd->gnm', qh, kh,
                        preferred_element_type=jnp.float32)   # (G, N, M)
    scores = scores - jnp.max(scores, axis=-1, keepdims=True)
    p = jnp.exp(scores)
    probs = p / jnp.sum(p, axis=-1, keepdims=True)            # exact f32 softmax

    o = jnp.einsum('gnm,gmd->gnd', probs.astype(mxu_dtype), vh,
                   preferred_element_type=jnp.float32)        # (G, N, D)

    # Back to [BB*N, H*D]: heads concatenated along lanes (== permute(0,2,1,3)
    # + view in the PyTorch module), batches along sublanes -> one dense store.
    rows = [jnp.concatenate([o[b * H + h] for h in range(H)], axis=-1)
            for b in range(BB)]
    out_ref[...] = jnp.concatenate(rows, axis=0).astype(out_ref.dtype)


def prepare_params(params, num_attention_heads, mxu_dtype=jnp.bfloat16):
    """One-time weight prep (hoisted out of the per-call path): transpose to
    [in, out], fold 1/sqrt(D) into the query projection, cast matmul operands
    to the MXU dtype, reshape biases to (1, out) f32 rows."""
    wq, bq = params["wq"], params["bq"]
    wk, bk = params["wk"], params["bk"]
    wv, bv = params["wv"], params["bv"]
    all_head = wq.shape[0]
    head_dim = all_head // num_attention_heads
    scale = 1.0 / math.sqrt(head_dim)
    return {
        "wq_t": (wq.T * scale).astype(mxu_dtype),          # (h1, H*D), scale folded
        "bq": (bq * scale).reshape(1, all_head).astype(jnp.float32),
        "wk_t": wk.T.astype(mxu_dtype),                    # (h2, H*D)
        "bk": bk.reshape(1, all_head).astype(jnp.float32),
        "wv_t": wv.T.astype(mxu_dtype),                    # (h2, H*D)
        "bv": bv.reshape(1, all_head).astype(jnp.float32),
    }


def attention_forward(hidden_states, context, prepared, num_attention_heads,
                      *, batch_block=None, mxu_dtype=jnp.bfloat16):
    """hidden_states: [B, N, h1], context: [B, M, h2] -> [B, N, all_head_size]."""
    B, N, h1 = hidden_states.shape
    Bc, M, h2 = context.shape
    assert Bc == B
    all_head = prepared["wq_t"].shape[1]
    H = num_attention_heads
    D = all_head // H

    # Default: fuse the whole batch into ONE grid step (best on single-TC
    # v5e/v6e — one tall projection matmul, no per-step overhead).  On v7x pass
    # batch_block=B//2 so the two grid steps shard across both TensorCores.
    if batch_block is None:
        batch_block = B
    assert B % batch_block == 0
    num_blocks = B // batch_block

    # Free (non-permuting) reshapes so the kernel sees plain 2-D operands and
    # never reshapes across lanes in-kernel.
    hid2 = hidden_states.reshape(B * N, h1)
    ctx2 = context.reshape(B * M, h2)

    kernel = functools.partial(
        _attention_kernel, batch_block=batch_block, n_q=N, n_kv=M,
        num_heads=H, head_dim=D, mxu_dtype=mxu_dtype)

    out2 = pl.pallas_call(
        kernel,
        out_shape=jax.ShapeDtypeStruct((B * N, all_head), hidden_states.dtype),
        grid=(num_blocks,),
        in_specs=[
            pl.BlockSpec((batch_block * N, h1), lambda g: (g, 0)),   # hidden rows
            pl.BlockSpec((batch_block * M, h2), lambda g: (g, 0)),   # context rows
            pl.BlockSpec((h1, all_head), lambda g: (0, 0)),          # Wq^T (resident)
            pl.BlockSpec((1, all_head), lambda g: (0, 0)),           # bq   (resident)
            pl.BlockSpec((h2, all_head), lambda g: (0, 0)),          # Wk^T (resident)
            pl.BlockSpec((1, all_head), lambda g: (0, 0)),           # bk   (resident)
            pl.BlockSpec((h2, all_head), lambda g: (0, 0)),          # Wv^T (resident)
            pl.BlockSpec((1, all_head), lambda g: (0, 0)),           # bv   (resident)
        ],
        out_specs=pl.BlockSpec((batch_block * N, all_head), lambda g: (g, 0)),
        compiler_params=pltpu.CompilerParams(
            dimension_semantics=("parallel",)),
    )(hid2, ctx2, prepared["wq_t"], prepared["bq"], prepared["wk_t"],
      prepared["bk"], prepared["wv_t"], prepared["bv"])

    return out2.reshape(B, N, all_head)


def init_params(key, hidden_size, ctx_dim, all_head_size):
    """Deterministic nn.Linear-style init: U(-1/sqrt(fan_in), 1/sqrt(fan_in))."""
    ks = jax.random.split(key, 6)

    def lin(kw, kb, out_dim, in_dim):
        bound = 1.0 / math.sqrt(in_dim)
        w = jax.random.uniform(kw, (out_dim, in_dim), jnp.float32, -bound, bound)
        b = jax.random.uniform(kb, (out_dim,), jnp.float32, -bound, bound)
        return w, b

    wq, bq = lin(ks[0], ks[1], all_head_size, hidden_size)
    wk, bk = lin(ks[2], ks[3], all_head_size, ctx_dim)
    wv, bv = lin(ks[4], ks[5], all_head_size, ctx_dim)
    return {"wq": wq, "bq": bq, "wk": wk, "bk": bk, "wv": wv, "bv": bv}


def _reference(hidden_states, context, params, num_heads):
    """Pure-JAX f32 reference matching the PyTorch module."""
    B, N, h1 = hidden_states.shape
    _, M, h2 = context.shape
    all_head = params["wq"].shape[0]
    D = all_head // num_heads
    q = hidden_states @ params["wq"].T + params["bq"]
    k = context @ params["wk"].T + params["bk"]
    v = context @ params["wv"].T + params["bv"]

    def split(x, L):
        return x.reshape(B, L, num_heads, D).transpose(0, 2, 1, 3)

    q, k, v = split(q, N), split(k, M), split(v, M)
    s = jnp.einsum("bhnd,bhmd->bhnm", q, k) / math.sqrt(D)
    p = jax.nn.softmax(s, axis=-1)
    o = jnp.einsum("bhnm,bhmd->bhnd", p, v)
    return o.transpose(0, 2, 1, 3).reshape(B, N, all_head)


if __name__ == "__main__":
    # Small shapes consistent with the module's forward.
    B, N, M = 2, 8, 8
    hidden_size = 32          # h1 (= all_head_size)
    ctx_dim = 32              # h2
    num_heads = 4             # head_dim = 8

    key = jax.random.PRNGKey(0)
    k_hid, k_ctx, k_par = jax.random.split(key, 3)
    hidden_states = jax.random.normal(k_hid, (B, N, hidden_size), jnp.float32)
    context = jax.random.normal(k_ctx, (B, M, ctx_dim), jnp.float32)
    params = init_params(k_par, hidden_size, ctx_dim, hidden_size)

    # One-time weight preparation (hoisted out of the forward path).
    prepared = prepare_params(params, num_heads, mxu_dtype=jnp.bfloat16)

    out = attention_forward(hidden_states, context, prepared, num_heads)
    out = jax.block_until_ready(out)

    ref = _reference(hidden_states, context, params, num_heads)
    assert out.shape == (B, N, hidden_size)
    # bf16 MXU operands with f32 accumulation: expect ~1e-2 abs deviation from
    # the exact-f32 reference at these magnitudes.
    assert jnp.allclose(out, ref, atol=3e-2, rtol=3e-2), \
        float(jnp.max(jnp.abs(out - ref)))

    print("KERNEL_OK")
</pallas_src>

<mosaic_0001>
module attributes {stable_mosaic.version = 11 : i64} {
  func.func @_attention_kernel(%arg0: i32, %arg1: memref<16x32xf32, #tpu.memory_space<vmem>>, %arg2: memref<16x32xf32, #tpu.memory_space<vmem>>, %arg3: memref<32x32xbf16, #tpu.memory_space<vmem>>, %arg4: memref<1x32xf32, #tpu.memory_space<vmem>>, %arg5: memref<32x32xbf16, #tpu.memory_space<vmem>>, %arg6: memref<1x32xf32, #tpu.memory_space<vmem>>, %arg7: memref<32x32xbf16, #tpu.memory_space<vmem>>, %arg8: memref<1x32xf32, #tpu.memory_space<vmem>>, %arg9: memref<16x32xf32, #tpu.memory_space<vmem>>) attributes {dimension_semantics = [#tpu.dimension_semantics<parallel>], iteration_bounds = array<i64: 1>, scalar_prefetch = 0 : i64, scratch_operands = 0 : i64, tpu.core_type = #tpu.core_type<tc>, window_params = [{transform_indices = @transform_0, window_bounds = array<i64: 16, 32>}, {transform_indices = @transform_1, window_bounds = array<i64: 16, 32>}, {pipeline_mode = #tpu.pipeline_mode<synchronous>, transform_indices = @transform_2, window_bounds = array<i64: 32, 32>}, {pipeline_mode = #tpu.pipeline_mode<synchronous>, transform_indices = @transform_3, window_bounds = array<i64: 1, 32>}, {pipeline_mode = #tpu.pipeline_mode<synchronous>, transform_indices = @transform_4, window_bounds = array<i64: 32, 32>}, {pipeline_mode = #tpu.pipeline_mode<synchronous>, transform_indices = @transform_5, window_bounds = array<i64: 1, 32>}, {pipeline_mode = #tpu.pipeline_mode<synchronous>, transform_indices = @transform_6, window_bounds = array<i64: 32, 32>}, {pipeline_mode = #tpu.pipeline_mode<synchronous>, transform_indices = @transform_7, window_bounds = array<i64: 1, 32>}, {transform_indices = @transform_8, window_bounds = array<i64: 16, 32>}]} {
    %c0 = arith.constant 0 : index
    %c0_0 = arith.constant 0 : index
    %0 = vector.load %arg1[%c0, %c0_0] : memref<16x32xf32, #tpu.memory_space<vmem>>, vector<16x32xf32>
    %1 = arith.truncf %0 : vector<16x32xf32> to vector<16x32xbf16>
    %c0_1 = arith.constant 0 : index
    %c0_2 = arith.constant 0 : index
    %2 = vector.load %arg2[%c0_1, %c0_2] : memref<16x32xf32, #tpu.memory_space<vmem>>, vector<16x32xf32>
    %3 = arith.truncf %2 : vector<16x32xf32> to vector<16x32xbf16>
    %c0_3 = arith.constant 0 : index
    %c0_4 = arith.constant 0 : index
    %4 = vector.load %arg3[%c0_3, %c0_4] : memref<32x32xbf16, #tpu.memory_space<vmem>>, vector<32x32xbf16>
    %cst = arith.constant dense<0.000000e+00> : vector<16x32xf32>
    %5 = tpu.matmul %1, %4, %cst {dimension_numbers = #tpu.dot_dimension_numbers<[1], [0], [0], [1], [0, 0, 1, 1], [], []>} : vector<16x32xbf16>, vector<32x32xbf16>, vector<16x32xf32> -> vector<16x32xf32>
    %c0_5 = arith.constant 0 : index
    %c0_6 = arith.constant 0 : index
    %6 = vector.load %arg4[%c0_5, %c0_6] : memref<1x32xf32, #tpu.memory_space<vmem>>, vector<1x32xf32>
    %7 = vector.broadcast %6 : vector<1x32xf32> to vector<16x32xf32>
    %8 = arith.addf %5, %7 : vector<16x32xf32>
    %c0_7 = arith.constant 0 : index
    %c0_8 = arith.constant 0 : index
    %9 = vector.load %arg5[%c0_7, %c0_8] : memref<32x32xbf16, #tpu.memory_space<vmem>>, vector<32x32xbf16>
    %cst_9 = arith.constant dense<0.000000e+00> : vector<16x32xf32>
    %10 = tpu.matmul %3, %9, %cst_9 {dimension_numbers = #tpu.dot_dimension_numbers<[1], [0], [0], [1], [0, 0, 1, 1], [], []>} : vector<16x32xbf16>, vector<32x32xbf16>, vector<16x32xf32> -> vector<16x32xf32>
    %c0_10 = arith.constant 0 : index
    %c0_11 = arith.constant 0 : index
    %11 = vector.load %arg6[%c0_10, %c0_11] : memref<1x32xf32, #tpu.memory_space<vmem>>, vector<1x32xf32>
    %12 = vector.broadcast %11 : vector<1x32xf32> to vector<16x32xf32>
    %13 = arith.addf %10, %12 : vector<16x32xf32>
    %c0_12 = arith.constant 0 : index
    %c0_13 = arith.constant 0 : index
    %14 = vector.load %arg7[%c0_12, %c0_13] : memref<32x32xbf16, #tpu.memory_space<vmem>>, vector<32x32xbf16>
    %cst_14 = arith.constant dense<0.000000e+00> : vector<16x32xf32>
    %15 = tpu.matmul %3, %14, %cst_14 {dimension_numbers = #tpu.dot_dimension_numbers<[1], [0], [0], [1], [0, 0, 1, 1], [], []>} : vector<16x32xbf16>, vector<32x32xbf16>, vector<16x32xf32> -> vector<16x32xf32>
    %c0_15 = arith.constant 0 : index
    %c0_16 = arith.constant 0 : index
    %16 = vector.load %arg8[%c0_15, %c0_16] : memref<1x32xf32, #tpu.memory_space<vmem>>, vector<1x32xf32>
    %17 = vector.broadcast %16 : vector<1x32xf32> to vector<16x32xf32>
    %18 = arith.addf %15, %17 : vector<16x32xf32>
    %19 = vector.extract_strided_slice %8 {offsets = [0, 0], sizes = [8, 8], strides = [1, 1]} : vector<16x32xf32> to vector<8x8xf32>
    %20 = vector.extract_strided_slice %8 {offsets = [0, 8], sizes = [8, 8], strides = [1, 1]} : vector<16x32xf32> to vector<8x8xf32>
    %21 = vector.extract_strided_slice %8 {offsets = [0, 16], sizes = [8, 8], strides = [1, 1]} : vector<16x32xf32> to vector<8x8xf32>
    %22 = vector.extract_strided_slice %8 {offsets = [0, 24], sizes = [8, 8], strides = [1, 1]} : vector<16x32xf32> to vector<8x8xf32>
    %23 = vector.extract_strided_slice %8 {offsets = [8, 0], sizes = [8, 8], strides = [1, 1]} : vector<16x32xf32> to vector<8x8xf32>
    %24 = vector.extract_strided_slice %8 {offsets = [8, 8], sizes = [8, 8], strides = [1, 1]} : vector<16x32xf32> to vector<8x8xf32>
    %25 = vector.extract_strided_slice %8 {offsets = [8, 16], sizes = [8, 8], strides = [1, 1]} : vector<16x32xf32> to vector<8x8xf32>
    %26 = vector.extract_strided_slice %8 {offsets = [8, 24], sizes = [8, 8], strides = [1, 1]} : vector<16x32xf32> to vector<8x8xf32>
    %27 = vector.shape_cast %19 : vector<8x8xf32> to vector<1x8x8xf32>
    %28 = vector.shape_cast %20 : vector<8x8xf32> to vector<1x8x8xf32>
    %29 = vector.shape_cast %21 : vector<8x8xf32> to vector<1x8x8xf32>
    %30 = vector.shape_cast %22 : vector<8x8xf32> to vector<1x8x8xf32>
    %31 = vector.shape_cast %23 : vector<8x8xf32> to vector<1x8x8xf32>
    %32 = vector.shape_cast %24 : vector<8x8xf32> to vector<1x8x8xf32>
    %33 = vector.shape_cast %25 : vector<8x8xf32> to vector<1x8x8xf32>
    %34 = vector.shape_cast %26 : vector<8x8xf32> to vector<1x8x8xf32>
    %35 = tpu.concatenate %27, %28, %29, %30, %31, %32, %33, %34 in 0 : vector<1x8x8xf32>, vector<1x8x8xf32>, vector<1x8x8xf32>, vector<1x8x8xf32>, vector<1x8x8xf32>, vector<1x8x8xf32>, vector<1x8x8xf32>, vector<1x8x8xf32> -> vector<8x8x8xf32>
    %36 = arith.truncf %35 : vector<8x8x8xf32> to vector<8x8x8xbf16>
    %37 = vector.extract_strided_slice %13 {offsets = [0, 0], sizes = [8, 8], strides = [1, 1]} : vector<16x32xf32> to vector<8x8xf32>
    %38 = vector.extract_strided_slice %13 {offsets = [0, 8], sizes = [8, 8], strides = [1, 1]} : vector<16x32xf32> to vector<8x8xf32>
    %39 = vector.extract_strided_slice %13 {offsets = [0, 16], sizes = [8, 8], strides = [1, 1]} : vector<16x32xf32> to vector<8x8xf32>
    %40 = vector.extract_strided_slice %13 {offsets = [0, 24], sizes = [8, 8], strides = [1, 1]} : vector<16x32xf32> to vector<8x8xf32>
    %41 = vector.extract_strided_slice %13 {offsets = [8, 0], sizes = [8, 8], strides = [1, 1]} : vector<16x32xf32> to vector<8x8xf32>
    %42 = vector.extract_strided_slice %13 {offsets = [8, 8], sizes = [8, 8], strides = [1, 1]} : vector<16x32xf32> to vector<8x8xf32>
    %43 = vector.extract_strided_slice %13 {offsets = [8, 16], sizes = [8, 8], strides = [1, 1]} : vector<16x32xf32> to vector<8x8xf32>
    %44 = vector.extract_strided_slice %13 {offsets = [8, 24], sizes = [8, 8], strides = [1, 1]} : vector<16x32xf32> to vector<8x8xf32>
    %45 = vector.shape_cast %37 : vector<8x8xf32> to vector<1x8x8xf32>
    %46 = vector.shape_cast %38 : vector<8x8xf32> to vector<1x8x8xf32>
    %47 = vector.shape_cast %39 : vector<8x8xf32> to vector<1x8x8xf32>
    %48 = vector.shape_cast %40 : vector<8x8xf32> to vector<1x8x8xf32>
    %49 = vector.shape_cast %41 : vector<8x8xf32> to vector<1x8x8xf32>
    %50 = vector.shape_cast %42 : vector<8x8xf32> to vector<1x8x8xf32>
    %51 = vector.shape_cast %43 : vector<8x8xf32> to vector<1x8x8xf32>
    %52 = vector.shape_cast %44 : vector<8x8xf32> to vector<1x8x8xf32>
    %53 = tpu.concatenate %45, %46, %47, %48, %49, %50, %51, %52 in 0 : vector<1x8x8xf32>, vector<1x8x8xf32>, vector<1x8x8xf32>, vector<1x8x8xf32>, vector<1x8x8xf32>, vector<1x8x8xf32>, vector<1x8x8xf32>, vector<1x8x8xf32> -> vector<8x8x8xf32>
    %54 = arith.truncf %53 : vector<8x8x8xf32> to vector<8x8x8xbf16>
    %55 = vector.extract_strided_slice %18 {offsets = [0, 0], sizes = [8, 8], strides = [1, 1]} : vector<16x32xf32> to vector<8x8xf32>
    %56 = vector.extract_strided_slice %18 {offsets = [0, 8], sizes = [8, 8], strides = [1, 1]} : vector<16x32xf32> to vector<8x8xf32>
    %57 = vector.extract_strided_slice %18 {offsets = [0, 16], sizes = [8, 8], strides = [1, 1]} : vector<16x32xf32> to vector<8x8xf32>
    %58 = vector.extract_strided_slice %18 {offsets = [0, 24], sizes = [8, 8], strides = [1, 1]} : vector<16x32xf32> to vector<8x8xf32>
    %59 = vector.extract_strided_slice %18 {offsets = [8, 0], sizes = [8, 8], strides = [1, 1]} : vector<16x32xf32> to vector<8x8xf32>
    %60 = vector.extract_strided_slice %18 {offsets = [8, 8], sizes = [8, 8], strides = [1, 1]} : vector<16x32xf32> to vector<8x8xf32>
    %61 = vector.extract_strided_slice %18 {offsets = [8, 16], sizes = [8, 8], strides = [1, 1]} : vector<16x32xf32> to vector<8x8xf32>
    %62 = vector.extract_strided_slice %18 {offsets = [8, 24], sizes = [8, 8], strides = [1, 1]} : vector<16x32xf32> to vector<8x8xf32>
    %63 = vector.shape_cast %55 : vector<8x8xf32> to vector<1x8x8xf32>
    %64 = vector.shape_cast %56 : vector<8x8xf32> to vector<1x8x8xf32>
    %65 = vector.shape_cast %57 : vector<8x8xf32> to vector<1x8x8xf32>
    %66 = vector.shape_cast %58 : vector<8x8xf32> to vector<1x8x8xf32>
    %67 = vector.shape_cast %59 : vector<8x8xf32> to vector<1x8x8xf32>
    %68 = vector.shape_cast %60 : vector<8x8xf32> to vector<1x8x8xf32>
    %69 = vector.shape_cast %61 : vector<8x8xf32> to vector<1x8x8xf32>
    %70 = vector.shape_cast %62 : vector<8x8xf32> to vector<1x8x8xf32>
    %71 = tpu.concatenate %63, %64, %65, %66, %67, %68, %69, %70 in 0 : vector<1x8x8xf32>, vector<1x8x8xf32>, vector<1x8x8xf32>, vector<1x8x8xf32>, vector<1x8x8xf32>, vector<1x8x8xf32>, vector<1x8x8xf32>, vector<1x8x8xf32> -> vector<8x8x8xf32>
    %72 = arith.truncf %71 : vector<8x8x8xf32> to vector<8x8x8xbf16>
    "tpu.trace_start"() <{level = 10 : i32, message = "gnd,gmd->gnm"}> : () -> ()
    %cst_17 = arith.constant dense<0.000000e+00> : vector<8x8x8xf32>
    %73 = tpu.matmul %36, %54, %cst_17 {dimension_numbers = #tpu.dot_dimension_numbers<[2], [2], [1], [1], [0, 0, 0, 1, 1, 1], [0], [0]>} : vector<8x8x8xbf16>, vector<8x8x8xbf16>, vector<8x8x8xf32> -> vector<8x8x8xf32>
    "tpu.trace_stop"() : () -> ()
    %cst_18 = arith.constant dense<0xFF800000> : vector<8x8xf32>
    %74 = vector.multi_reduction <maximumf>, %73, %cst_18 [2] : vector<8x8x8xf32> to vector<8x8xf32>
    %75 = vector.shape_cast %74 : vector<8x8xf32> to vector<8x8x1xf32>
    %76 = vector.broadcast %75 : vector<8x8x1xf32> to vector<8x8x8xf32>
    %77 = arith.subf %73, %76 : vector<8x8x8xf32>
    %78 = math.exp %77 : vector<8x8x8xf32>
    %cst_19 = arith.constant dense<0.000000e+00> : vector<8x8xf32>
    %79 = vector.multi_reduction <add>, %78, %cst_19 [2] : vector<8x8x8xf32> to vector<8x8xf32>
    %80 = vector.shape_cast %79 : vector<8x8xf32> to vector<8x8x1xf32>
    %81 = vector.broadcast %80 : vector<8x8x1xf32> to vector<8x8x8xf32>
    %82 = arith.divf %78, %81 : vector<8x8x8xf32>
    %83 = arith.truncf %82 : vector<8x8x8xf32> to vector<8x8x8xbf16>
    "tpu.trace_start"() <{level = 10 : i32, message = "gnm,gmd->gnd"}> : () -> ()
    %cst_20 = arith.constant dense<0.000000e+00> : vector<8x8x8xf32>
    %84 = tpu.matmul %83, %72, %cst_20 {dimension_numbers = #tpu.dot_dimension_numbers<[2], [1], [1], [2], [0, 0, 0, 1, 1, 2], [0], [0]>} : vector<8x8x8xbf16>, vector<8x8x8xbf16>, vector<8x8x8xf32> -> vector<8x8x8xf32>
    "tpu.trace_stop"() : () -> ()
    %85 = vector.extract_strided_slice %84 {offsets = [0, 0, 0], sizes = [1, 8, 8], strides = [1, 1, 1]} : vector<8x8x8xf32> to vector<1x8x8xf32>
    %86 = vector.shape_cast %85 : vector<1x8x8xf32> to vector<8x8xf32>
    %87 = vector.extract_strided_slice %84 {offsets = [1, 0, 0], sizes = [1, 8, 8], strides = [1, 1, 1]} : vector<8x8x8xf32> to vector<1x8x8xf32>
    %88 = vector.shape_cast %87 : vector<1x8x8xf32> to vector<8x8xf32>
    %89 = vector.extract_strided_slice %84 {offsets = [2, 0, 0], sizes = [1, 8, 8], strides = [1, 1, 1]} : vector<8x8x8xf32> to vector<1x8x8xf32>
    %90 = vector.shape_cast %89 : vector<1x8x8xf32> to vector<8x8xf32>
    %91 = vector.extract_strided_slice %84 {offsets = [3, 0, 0], sizes = [1, 8, 8], strides = [1, 1, 1]} : vector<8x8x8xf32> to vector<1x8x8xf32>
    %92 = vector.shape_cast %91 : vector<1x8x8xf32> to vector<8x8xf32>
    %93 = tpu.concatenate %86, %88, %90, %92 in 1 : vector<8x8xf32>, vector<8x8xf32>, vector<8x8xf32>, vector<8x8xf32> -> vector<8x32xf32>
    %94 = vector.extract_strided_slice %84 {offsets = [4, 0, 0], sizes = [1, 8, 8], strides = [1, 1, 1]} : vector<8x8x8xf32> to vector<1x8x8xf32>
    %95 = vector.shape_cast %94 : vector<1x8x8xf32> to vector<8x8xf32>
    %96 = vector.extract_strided_slice %84 {offsets = [5, 0, 0], sizes = [1, 8, 8], strides = [1, 1, 1]} : vector<8x8x8xf32> to vector<1x8x8xf32>
    %97 = vector.shape_cast %96 : vector<1x8x8xf32> to vector<8x8xf32>
    %98 = vector.extract_strided_slice %84 {offsets = [6, 0, 0], sizes = [1, 8, 8], strides = [1, 1, 1]} : vector<8x8x8xf32> to vector<1x8x8xf32>
    %99 = vector.shape_cast %98 : vector<1x8x8xf32> to vector<8x8xf32>
    %100 = vector.extract_strided_slice %84 {offsets = [7, 0, 0], sizes = [1, 8, 8], strides = [1, 1, 1]} : vector<8x8x8xf32> to vector<1x8x8xf32>
    %101 = vector.shape_cast %100 : vector<1x8x8xf32> to vector<8x8xf32>
    %102 = tpu.concatenate %95, %97, %99, %101 in 1 : vector<8x8xf32>, vector<8x8xf32>, vector<8x8xf32>, vector<8x8xf32> -> vector<8x32xf32>
    %103 = tpu.concatenate %93, %102 in 0 : vector<8x32xf32>, vector<8x32xf32> -> vector<16x32xf32>
    %c0_21 = arith.constant 0 : index
    %c0_22 = arith.constant 0 : index
    %104 = vector.load %arg9[%c0_21, %c0_22] : memref<16x32xf32, #tpu.memory_space<vmem>>, vector<16x32xf32>
    tpu.vector_store %arg9[%c0_21, %c0_22], %103 {strides = array<i32>} : memref<16x32xf32, #tpu.memory_space<vmem>>, vector<16x32xf32>,
    return
  }
  func.func @transform_0(%arg0: i32) -> (i32, i32) {
    %c0_i32 = arith.constant 0 : i32
    %c0_i32_0 = arith.constant 0 : i32
    return %arg0, %c0_i32 : i32, i32
  }
  func.func @transform_1(%arg0: i32) -> (i32, i32) {
    %c0_i32 = arith.constant 0 : i32
    %c0_i32_0 = arith.constant 0 : i32
    return %arg0, %c0_i32 : i32, i32
  }
  func.func @transform_2(%arg0: i32) -> (i32, i32) {
    %c0_i32 = arith.constant 0 : i32
    %c0_i32_0 = arith.constant 0 : i32
    %c0_i32_1 = arith.constant 0 : i32
    return %c0_i32, %c0_i32_0 : i32, i32
  }
  func.func @transform_3(%arg0: i32) -> (i32, i32) {
    %c0_i32 = arith.constant 0 : i32
    %c0_i32_0 = arith.constant 0 : i32
    %c0_i32_1 = arith.constant 0 : i32
    return %c0_i32, %c0_i32_0 : i32, i32
  }
  func.func @transform_4(%arg0: i32) -> (i32, i32) {
    %c0_i32 = arith.constant 0 : i32
    %c0_i32_0 = arith.constant 0 : i32
    %c0_i32_1 = arith.constant 0 : i32
    return %c0_i32, %c0_i32_0 : i32, i32
  }
  func.func @transform_5(%arg0: i32) -> (i32, i32) {
    %c0_i32 = arith.constant 0 : i32
    %c0_i32_0 = arith.constant 0 : i32
    %c0_i32_1 = arith.constant 0 : i32
    return %c0_i32, %c0_i32_0 : i32, i32
  }
  func.func @transform_6(%arg0: i32) -> (i32, i32) {
    %c0_i32 = arith.constant 0 : i32
    %c0_i32_0 = arith.constant 0 : i32
    %c0_i32_1 = arith.constant 0 : i32
    return %c0_i32, %c0_i32_0 : i32, i32
  }
  func.func @transform_7(%arg0: i32) -> (i32, i32) {
    %c0_i32 = arith.constant 0 : i32
    %c0_i32_0 = arith.constant 0 : i32
    %c0_i32_1 = arith.constant 0 : i32
    return %c0_i32, %c0_i32_0 : i32, i32
  }
  func.func @transform_8(%arg0: i32) -> (i32, i32) {
    %c0_i32 = arith.constant 0 : i32
    %c0_i32_0 = arith.constant 0 : i32
    return %arg0, %c0_i32 : i32, i32
  }
}

</mosaic_0001>

<llo_original>
// kernel: tpu_custom_call.1
$region0: #{tpu_custom_call.1}
  #allocation0 [shape = 'u32[]', space=smem, size = 0x4, offset = 0x4, fixed_abs, tag = 'smem constant byte address 0x4 - core index']
  #allocation1 [shape = 'u32[72,128]{1,0:T(1,128)}', space=vmem, size = 0x9000, scoped, tag = 'internal scratch']
  %s0 = inlined_call_operand.hbm [shape: f32[16,32], index: 0, kind: input, shape index: {}]
  %s1 = inlined_call_operand.hbm [shape: f32[16,32], index: 1, kind: input, shape index: {}]
  %s2 = inlined_call_operand.hbm [shape: bf16[32,32], index: 2, kind: input, shape index: {}]
  %s3 = inlined_call_operand.vmem [shape: f32[1,32], index: 3, kind: input, shape index: {}]
  %s4 = inlined_call_operand.hbm [shape: bf16[32,32], index: 4, kind: input, shape index: {}]
  %s5 = inlined_call_operand.vmem [shape: f32[1,32], index: 5, kind: input, shape index: {}]
  %s6 = inlined_call_operand.hbm [shape: bf16[32,32], index: 6, kind: input, shape index: {}]
  %s7 = inlined_call_operand.vmem [shape: f32[1,32], index: 7, kind: input, shape index: {}]
  %s8 = inlined_call_operand.hbm [shape: f32[16,32], index: 8, kind: output, shape index: {}]
  %s9 = sld [smem:[#allocation0]]
  $region62: #{tpu_custom_call.1} parent=0
    _
  %s11 = ssub.s32 1, %s9
  %s12 = scalar_select 0, %s11, %s9
  $region1: #{tpu_custom_call.1} parent=0
    #allocation2 [shape = 'u8[8192]{0}', space=vmem, size = 0x2000, scoped, tag = 'input window, operand 0, single buffered']
    #allocation3 [shape = 's32[1]{0}', space=sflag, size = 0x4, scoped, tag = 'scoped memory for tpu_custom_call.1']
    #allocation4 [shape = 's32[1]{0}', space=sflag, size = 0x4, scoped, tag = 'scoped memory for tpu_custom_call.1']
    #allocation5 [shape = 'u8[8192]{0}', space=vmem, size = 0x2000, scoped, tag = 'input window, operand 1, single buffered']
    #allocation6 [shape = 's32[1]{0}', space=sflag, size = 0x4, scoped, tag = 'scoped memory for tpu_custom_call.1']
    #allocation7 [shape = 'u8[8192]{0}', space=vmem, size = 0x2000, scoped, tag = 'input window, operand 2, single buffered']
    #allocation8 [shape = 'u8[8192]{0}', space=vmem, size = 0x2000, scoped, tag = 'input window, operand 4, single buffered']
    #allocation9 [shape = 's32[1]{0}', space=sflag, size = 0x4, scoped, tag = 'scoped memory for tpu_custom_call.1']
    #allocation10 [shape = 'u8[8192]{0}', space=vmem, size = 0x2000, scoped, tag = 'input window, operand 6, single buffered']
    #allocation11 [shape = 'u8[8192]{0}', space=vmem, size = 0x2000, scoped, tag = 'output window, operand 0, single buffered']
    %13 = vsyncpa [#allocation3], 0
    %14 = vsyncpa [#allocation6], 0
    %15 = vsyncpa [#allocation9], 0
    %16 = vsyncpa [#allocation4], 0
    // Predicated region
    $region2: #{tpu_custom_call.1} parent=1 // pred_check
      _
    $region3: #{tpu_custom_call.1} parent=1 // pred_check_branch
      %18 = sbr.rel (0) target = $region5
    $region4: #{tpu_custom_call.1} parent=1 // pred_region
      %20 = vsyncadd [#allocation3], 0
      %s21 = sshll.u32 %s0, 4
      %s22 = int_to_ptr.hbm [resolvable:$true] %s21
      %s23 = sshll.u32 [#allocation2], 4
      %s24 = int_to_ptr.vmem [resolvable:$true] %s23
      %29 = dma.hbm_to_vmem [thread:$0]  %s22, 256, %s24, [#allocation3], 128, 128, 8
    $region5: #{tpu_custom_call.1} parent=1 // pred_fallthru
      _
    // Predicated region
    $region6: #{tpu_custom_call.1} parent=1 // pred_check
      _
    $region7: #{tpu_custom_call.1} parent=1 // pred_check_branch
      %31 = sbr.rel (0) target = $region9
    $region8: #{tpu_custom_call.1} parent=1 // pred_region
      %33 = vsyncadd [#allocation6], 0
      %s34 = sshll.u32 %s1, 4
      %s35 = int_to_ptr.hbm [resolvable:$true] %s34
      %s36 = sshll.u32 [#allocation5], 4
      %s37 = int_to_ptr.vmem [resolvable:$true] %s36
      %42 = dma.hbm_to_vmem [thread:$0]  %s35, 256, %s37, [#allocation6], 128, 128, 8
    $region9: #{tpu_custom_call.1} parent=1 // pred_fallthru
      _
    // Predicated region
    $region10: #{tpu_custom_call.1} parent=1 // pred_check
      _
    $region11: #{tpu_custom_call.1} parent=1 // pred_check_branch
      %44 = sbr.rel (0) target = $region13
    $region12: #{tpu_custom_call.1} parent=1 // pred_region
      %46 = vsyncadd [#allocation6], 0
      %s47 = sshll.u32 %s2, 4
      %s48 = int_to_ptr.hbm [resolvable:$true] %s47
      %s49 = sshll.u32 [#allocation7], 4
      %s50 = int_to_ptr.vmem [resolvable:$true] %s49
      %55 = dma.hbm_to_vmem [thread:$0]  %s48, 256, %s50, [#allocation6], 64, 64, 4
    $region13: #{tpu_custom_call.1} parent=1 // pred_fallthru
      _
    // Predicated region
    $region14: #{tpu_custom_call.1} parent=1 // pred_check
      _
    $region15: #{tpu_custom_call.1} parent=1 // pred_check_branch
      %57 = sbr.rel (0) target = $region17
    $region16: #{tpu_custom_call.1} parent=1 // pred_region
      _
    $region17: #{tpu_custom_call.1} parent=1 // pred_fallthru
      _
    // Predicated region
    $region18: #{tpu_custom_call.1} parent=1 // pred_check
      _
    $region19: #{tpu_custom_call.1} parent=1 // pred_check_branch
      %59 = sbr.rel (0) target = $region21
    $region20: #{tpu_custom_call.1} parent=1 // pred_region
      %61 = vsyncadd [#allocation9], 0
      %s62 = sshll.u32 %s4, 4
      %s63 = int_to_ptr.hbm [resolvable:$true] %s62
      %s64 = sshll.u32 [#allocation8], 4
      %s65 = int_to_ptr.vmem [resolvable:$true] %s64
      %70 = dma.hbm_to_vmem [thread:$0]  %s63, 256, %s65, [#allocation9], 64, 64, 4
    $region21: #{tpu_custom_call.1} parent=1 // pred_fallthru
      _
    // Predicated region
    $region22: #{tpu_custom_call.1} parent=1 // pred_check
      _
    $region23: #{tpu_custom_call.1} parent=1 // pred_check_branch
      %72 = sbr.rel (0) target = $region25
    $region24: #{tpu_custom_call.1} parent=1 // pred_region
      _
    $region25: #{tpu_custom_call.1} parent=1 // pred_fallthru
      _
    // Predicated region
    $region26: #{tpu_custom_call.1} parent=1 // pred_check
      _
    $region27: #{tpu_custom_call.1} parent=1 // pred_check_branch
      %74 = sbr.rel (0) target = $region29
    $region28: #{tpu_custom_call.1} parent=1 // pred_region
      %76 = vsyncadd [#allocation9], 0
      %s77 = sshll.u32 %s6, 4
      %s78 = int_to_ptr.hbm [resolvable:$true] %s77
      %s79 = sshll.u32 [#allocation10], 4
      %s80 = int_to_ptr.vmem [resolvable:$true] %s79
      %85 = dma.hbm_to_vmem [thread:$0]  %s78, 256, %s80, [#allocation9], 64, 64, 4
    $region29: #{tpu_custom_call.1} parent=1 // pred_fallthru
      _
    // Predicated region
    $region30: #{tpu_custom_call.1} parent=1 // pred_check
      _
    $region31: #{tpu_custom_call.1} parent=1 // pred_check_branch
      %87 = sbr.rel (0) target = $region33
    $region32: #{tpu_custom_call.1} parent=1 // pred_region
      _
    $region33: #{tpu_custom_call.1} parent=1 // pred_fallthru
      _
    // Predicated region
    $region34: #{tpu_custom_call.1} parent=1 // pred_check
      _
    $region35: #{tpu_custom_call.1} parent=1 // pred_check_branch
      %89 = sbr.rel (0) target = $region37
    $region36: #{tpu_custom_call.1} parent=1 // pred_region
      %91 = dma.done [#allocation3], 256
    $region37: #{tpu_custom_call.1} parent=1 // pred_fallthru
      _
    // Predicated region
    $region38: #{tpu_custom_call.1} parent=1 // pred_check
      _
    $region39: #{tpu_custom_call.1} parent=1 // pred_check_branch
      %93 = sbr.rel (0) target = $region41
    $region40: #{tpu_custom_call.1} parent=1 // pred_region
      %95 = dma.done [#allocation6], 256
    $region41: #{tpu_custom_call.1} parent=1 // pred_fallthru
      _
    // Predicated region
    $region42: #{tpu_custom_call.1} parent=1 // pred_check
      _
    $region43: #{tpu_custom_call.1} parent=1 // pred_check_branch
      %97 = sbr.rel (0) target = $region45
    $region44: #{tpu_custom_call.1} parent=1 // pred_region
      %99 = dma.done [#allocation6], 256
    $region45: #{tpu_custom_call.1} parent=1 // pred_fallthru
      _
    // Predicated region
    $region46: #{tpu_custom_call.1} parent=1 // pred_check
      _
    $region47: #{tpu_custom_call.1} parent=1 // pred_check_branch
      %101 = sbr.rel (0) target = $region49
    $region48: #{tpu_custom_call.1} parent=1 // pred_region
      %103 = dma.done [#allocation9], 256
    $region49: #{tpu_custom_call.1} parent=1 // pred_fallthru
      _
    // Predicated region
    $region50: #{tpu_custom_call.1} parent=1 // pred_check
      _
    $region51: #{tpu_custom_call.1} parent=1 // pred_check_branch
      %105 = sbr.rel (0) target = $region53
    $region52: #{tpu_custom_call.1} parent=1 // pred_region
      %107 = dma.done [#allocation9], 256
    $region53: #{tpu_custom_call.1} parent=1 // pred_fallthru
      _
    %v109 = vld [vmem:[#allocation2] sm:$0xff]
    %v110 = vld [vmem:[#allocation2 + $0x8] sm:$0xff]
    %v111 = vpack.c.bf16 %v110, %v109
    %v112 = vld [vmem:[#allocation5] sm:$0xff]
    %v113 = vld [vmem:[#allocation5 + $0x8] sm:$0xff]
    %v114 = vpack.c.bf16 %v113, %v112
    %v115 = vld [vmem:[#allocation7] sm:$0xf]
    %v116 = vld [vmem:[#allocation7 + $0x4] sm:$0xf]
    %v117 = vld [vmem:[#allocation7 + $0x8] sm:$0xf]
    %v118 = vld [vmem:[#allocation7 + $0xc] sm:$0xf]
    %v119 = vld [vmem:[%s3] sm:$0x1]
    %v121 = vperm.slane %v119, 0
    %v127 = vunpack.c.l.b16 %v115
    %v128 = vunpack.c.l.b16 %v116
    %v129 = vunpack.c.l.b16 %v117
    %v130 = vunpack.c.l.b16 %v118
    %v131 = vpack.c.b16 %v128, %v127
    %v132 = vpack.c.b16 %v130, %v129
    %vm135 = vcmask 261120
    %v137 = vsel %vm135, %v111, 0
    %139 = vmatpush.bf16.msra.mxu0 0
    %140 = vmatpush.bf16.msra.mxu0 0
    %141 = vmatpush.bf16.msra.mxu0 0
    %142 = vmatpush.bf16.msra.mxu0 0
    %143 = vmatpush.bf16.msra.mxu0 0
    %144 = vmatpush.bf16.msra.mxu0 0
    %145 = vmatpush.bf16.msra.mxu0 %v132
    %146 = vmatpush.bf16.msra.mxu0 %v131
    %147 = vmatmul.bf16.gmra.mxu0 %v137
    %v148 = vpop.f32.mrf.mxu0
    %v149 = vadd.f32 %v121, %v148
    %v150 = vpop.f32.mrf.mxu0
    %v151 = vadd.f32 %v121, %v150
    %152 = vdwg.mxu0
    %v153 = vld [vmem:[#allocation8] sm:$0xf]
    %v154 = vld [vmem:[#allocation8 + $0x4] sm:$0xf]
    %v155 = vld [vmem:[#allocation8 + $0x8] sm:$0xf]
    %v156 = vld [vmem:[#allocation8 + $0xc] sm:$0xf]
    %v157 = vld [vmem:[%s5] sm:$0x1]
    %v159 = vperm.slane %v157, 0
    %v165 = vunpack.c.l.b16 %v153
    %v166 = vunpack.c.l.b16 %v154
    %v167 = vunpack.c.l.b16 %v155
    %v168 = vunpack.c.l.b16 %v156
    %v169 = vpack.c.b16 %v166, %v165
    %v170 = vpack.c.b16 %v168, %v167
    %v174 = vsel %vm135, %v114, 0
    %176 = vmatpush.bf16.msra.mxu0 0
    %177 = vmatpush.bf16.msra.mxu0 0
    %178 = vmatpush.bf16.msra.mxu0 0
    %179 = vmatpush.bf16.msra.mxu0 0
    %180 = vmatpush.bf16.msra.mxu0 0
    %181 = vmatpush.bf16.msra.mxu0 0
    %182 = vmatpush.bf16.msra.mxu0 %v170
    %183 = vmatpush.bf16.msra.mxu0 %v169
    %184 = vmatmul.bf16.gmra.mxu0 %v174
    %v185 = vpop.f32.mrf.mxu0
    %v186 = vadd.f32 %v159, %v185
    %v187 = vpop.f32.mrf.mxu0
    %v188 = vadd.f32 %v159, %v187
    %189 = vdwg.mxu0
    %v190 = vld [vmem:[#allocation10] sm:$0xf]
    %v191 = vld [vmem:[#allocation10 + $0x4] sm:$0xf]
    %v192 = vld [vmem:[#allocation10 + $0x8] sm:$0xf]
    %v193 = vld [vmem:[#allocation10 + $0xc] sm:$0xf]
    %v194 = vld [vmem:[%s7] sm:$0x1]
    %v196 = vperm.slane %v194, 0
    %v202 = vunpack.c.l.b16 %v190
    %v203 = vunpack.c.l.b16 %v191
    %v204 = vunpack.c.l.b16 %v192
    %v205 = vunpack.c.l.b16 %v193
    %v206 = vpack.c.b16 %v203, %v202
    %v207 = vpack.c.b16 %v205, %v204
    %210 = vmatpush.bf16.msra.mxu0 0
    %211 = vmatpush.bf16.msra.mxu0 0
    %212 = vmatpush.bf16.msra.mxu0 0
    %213 = vmatpush.bf16.msra.mxu0 0
    %214 = vmatpush.bf16.msra.mxu0 0
    %215 = vmatpush.bf16.msra.mxu0 0
    %216 = vmatpush.bf16.msra.mxu0 %v207
    %217 = vmatpush.bf16.msra.mxu0 %v206
    %218 = vmatmul.bf16.gmra.mxu0 %v174
    %v219 = vpop.f32.mrf.mxu0
    %v220 = vadd.f32 %v196, %v219
    %v221 = vpop.f32.mrf.mxu0
    %v222 = vadd.f32 %v196, %v221
    %223 = vdwg.mxu0
    %225 = vrot.lane.b32.xlu0 %v149, 120
    %v226 = vpop.permute.xlu0 %225
    %228 = vrot.lane.b32.xlu0 %v149, 112
    %v229 = vpop.permute.xlu0 %228
    %231 = vrot.lane.b32.xlu0 %v149, 104
    %v232 = vpop.permute.xlu0 %231
    %235 = vrot.lane.b32.xlu0 %v151, 120
    %v236 = vpop.permute.xlu0 %235
    %238 = vrot.lane.b32.xlu0 %v151, 112
    %v239 = vpop.permute.xlu0 %238
    %241 = vrot.lane.b32.xlu0 %v151, 104
    %v242 = vpop.permute.xlu0 %241
    %v244 = vpack.c.bf16 %v149, %v149
    %v245 = vpack.c.bf16 %v226, %v226
    %v246 = vpack.c.bf16 %v229, %v229
    %v247 = vpack.c.bf16 %v232, %v232
    %v248 = vpack.c.bf16 %v151, %v151
    %v249 = vpack.c.bf16 %v236, %v236
    %v250 = vpack.c.bf16 %v239, %v239
    %v251 = vpack.c.bf16 %v242, %v242
    %253 = vrot.lane.b32.xlu0 %v186, 120
    %v254 = vpop.permute.xlu0 %253
    %256 = vrot.lane.b32.xlu0 %v186, 112
    %v257 = vpop.permute.xlu0 %256
    %259 = vrot.lane.b32.xlu0 %v186, 104
    %v260 = vpop.permute.xlu0 %259
    %263 = vrot.lane.b32.xlu0 %v188, 120
    %v264 = vpop.permute.xlu0 %263
    %266 = vrot.lane.b32.xlu0 %v188, 112
    %v267 = vpop.permute.xlu0 %266
    %269 = vrot.lane.b32.xlu0 %v188, 104
    %v270 = vpop.permute.xlu0 %269
    %v272 = vpack.c.bf16 %v186, %v186
    %v273 = vpack.c.bf16 %v254, %v254
    %v274 = vpack.c.bf16 %v257, %v257
    %v275 = vpack.c.bf16 %v260, %v260
    %v276 = vpack.c.bf16 %v188, %v188
    %v277 = vpack.c.bf16 %v264, %v264
    %v278 = vpack.c.bf16 %v267, %v267
    %v279 = vpack.c.bf16 %v270, %v270
    %281 = vrot.lane.b32.xlu0 %v220, 120
    %v282 = vpop.permute.xlu0 %281
    %284 = vrot.lane.b32.xlu0 %v220, 112
    %v285 = vpop.permute.xlu0 %284
    %287 = vrot.lane.b32.xlu0 %v220, 104
    %v288 = vpop.permute.xlu0 %287
    %291 = vrot.lane.b32.xlu0 %v222, 120
    %v292 = vpop.permute.xlu0 %291
    %294 = vrot.lane.b32.xlu0 %v222, 112
    %v295 = vpop.permute.xlu0 %294
    %297 = vrot.lane.b32.xlu0 %v222, 104
    %v298 = vpop.permute.xlu0 %297
    %v300 = vpack.c.bf16 %v220, %v220
    %v301 = vpack.c.bf16 %v282, %v282
    %v302 = vpack.c.bf16 %v285, %v285
    %v303 = vpack.c.bf16 %v288, %v288
    %v304 = vpack.c.bf16 %v222, %v222
    %v305 = vpack.c.bf16 %v292, %v292
    %v306 = vpack.c.bf16 %v295, %v295
    %v307 = vpack.c.bf16 %v298, %v298
    %vm308 = vcmask 64512
    %v310 = vsel %vm308, %v244, 0
    %v313 = vsel %vm308, %v272, 0
    %315 = vmatpush.bf16.xpose.msra.mxu0 0
    %316 = vmatpush.bf16.xpose.msra.mxu0 0
    %317 = vmatpush.bf16.xpose.msra.mxu0 0
    %318 = vmatpush.bf16.xpose.msra.mxu0 0
    %319 = vmatpush.bf16.xpose.msra.mxu0 0
    %320 = vmatpush.bf16.xpose.msra.mxu0 0
    %321 = vmatpush.bf16.xpose.msra.mxu0 0
    %322 = vmatpush.bf16.xpose.msra.mxu0 %v313
    %323 = vmatmul.bf16.gmra.mxu0 %v310
    %v324 = vpop.f32.mrf.mxu0
    %v325 = vadd.f32 0.0, %v324
    %v326 = vpop.f32.mrf.mxu0
    %327 = vdwg.mxu0
    %v329 = vsel %vm308, %v245, 0
    %v332 = vsel %vm308, %v273, 0
    %334 = vmatpush.bf16.xpose.msra.mxu0 0
    %335 = vmatpush.bf16.xpose.msra.mxu0 0
    %336 = vmatpush.bf16.xpose.msra.mxu0 0
    %337 = vmatpush.bf16.xpose.msra.mxu0 0
    %338 = vmatpush.bf16.xpose.msra.mxu0 0
    %339 = vmatpush.bf16.xpose.msra.mxu0 0
    %340 = vmatpush.bf16.xpose.msra.mxu0 0
    %341 = vmatpush.bf16.xpose.msra.mxu0 %v332
    %342 = vmatmul.bf16.gmra.mxu0 %v329
    %v343 = vpop.f32.mrf.mxu0
    %v344 = vadd.f32 0.0, %v343
    %v345 = vpop.f32.mrf.mxu0
    %346 = vdwg.mxu0
    %v348 = vsel %vm308, %v246, 0
    %v351 = vsel %vm308, %v274, 0
    %353 = vmatpush.bf16.xpose.msra.mxu0 0
    %354 = vmatpush.bf16.xpose.msra.mxu0 0
    %355 = vmatpush.bf16.xpose.msra.mxu0 0
    %356 = vmatpush.bf16.xpose.msra.mxu0 0
    %357 = vmatpush.bf16.xpose.msra.mxu0 0
    %358 = vmatpush.bf16.xpose.msra.mxu0 0
    %359 = vmatpush.bf16.xpose.msra.mxu0 0
    %360 = vmatpush.bf16.xpose.msra.mxu0 %v351
    %361 = vmatmul.bf16.gmra.mxu0 %v348
    %v362 = vpop.f32.mrf.mxu0
    %v363 = vadd.f32 0.0, %v362
    %v364 = vpop.f32.mrf.mxu0
    %365 = vdwg.mxu0
    %v367 = vsel %vm308, %v247, 0
    %v370 = vsel %vm308, %v275, 0
    %372 = vmatpush.bf16.xpose.msra.mxu0 0
    %373 = vmatpush.bf16.xpose.msra.mxu0 0
    %374 = vmatpush.bf16.xpose.msra.mxu0 0
    %375 = vmatpush.bf16.xpose.msra.mxu0 0
    %376 = vmatpush.bf16.xpose.msra.mxu0 0
    %377 = vmatpush.bf16.xpose.msra.mxu0 0
    %378 = vmatpush.bf16.xpose.msra.mxu0 0
    %379 = vmatpush.bf16.xpose.msra.mxu0 %v370
    %380 = vmatmul.bf16.gmra.mxu0 %v367
    %v381 = vpop.f32.mrf.mxu0
    %v382 = vadd.f32 0.0, %v381
    %v383 = vpop.f32.mrf.mxu0
    %384 = vdwg.mxu0
    %v386 = vsel %vm308, %v248, 0
    %v389 = vsel %vm308, %v276, 0
    %391 = vmatpush.bf16.xpose.msra.mxu0 0
    %392 = vmatpush.bf16.xpose.msra.mxu0 0
    %393 = vmatpush.bf16.xpose.msra.mxu0 0
    %394 = vmatpush.bf16.xpose.msra.mxu0 0
    %395 = vmatpush.bf16.xpose.msra.mxu0 0
    %396 = vmatpush.bf16.xpose.msra.mxu0 0
    %397 = vmatpush.bf16.xpose.msra.mxu0 0
    %398 = vmatpush.bf16.xpose.msra.mxu0 %v389
    %399 = vmatmul.bf16.gmra.mxu0 %v386
    %v400 = vpop.f32.mrf.mxu0
    %v401 = vadd.f32 0.0, %v400
    %v402 = vpop.f32.mrf.mxu0
    %403 = vdwg.mxu0
    %v405 = vsel %vm308, %v249, 0
    %v408 = vsel %vm308, %v277, 0
    %410 = vmatpush.bf16.xpose.msra.mxu0 0
    %411 = vmatpush.bf16.xpose.msra.mxu0 0
    %412 = vmatpush.bf16.xpose.msra.mxu0 0
    %413 = vmatpush.bf16.xpose.msra.mxu0 0
    %414 = vmatpush.bf16.xpose.msra.mxu0 0
    %415 = vmatpush.bf16.xpose.msra.mxu0 0
    %416 = vmatpush.bf16.xpose.msra.mxu0 0
    %417 = vmatpush.bf16.xpose.msra.mxu0 %v408
    %418 = vmatmul.bf16.gmra.mxu0 %v405
    %v419 = vpop.f32.mrf.mxu0
    %v420 = vadd.f32 0.0, %v419
    %v421 = vpop.f32.mrf.mxu0
    %422 = vdwg.mxu0
    %v424 = vsel %vm308, %v250, 0
    %v427 = vsel %vm308, %v278, 0
    %429 = vmatpush.bf16.xpose.msra.mxu0 0
    %430 = vmatpush.bf16.xpose.msra.mxu0 0
    %431 = vmatpush.bf16.xpose.msra.mxu0 0
    %432 = vmatpush.bf16.xpose.msra.mxu0 0
    %433 = vmatpush.bf16.xpose.msra.mxu0 0
    %434 = vmatpush.bf16.xpose.msra.mxu0 0
    %435 = vmatpush.bf16.xpose.msra.mxu0 0
    %436 = vmatpush.bf16.xpose.msra.mxu0 %v427
    %437 = vmatmul.bf16.gmra.mxu0 %v424
    %v438 = vpop.f32.mrf.mxu0
    %v439 = vadd.f32 0.0, %v438
    %v440 = vpop.f32.mrf.mxu0
    %441 = vdwg.mxu0
    %v443 = vsel %vm308, %v251, 0
    %v446 = vsel %vm308, %v279, 0
    %448 = vmatpush.bf16.xpose.msra.mxu0 0
    %449 = vmatpush.bf16.xpose.msra.mxu0 0
    %450 = vmatpush.bf16.xpose.msra.mxu0 0
    %451 = vmatpush.bf16.xpose.msra.mxu0 0
    %452 = vmatpush.bf16.xpose.msra.mxu0 0
    %453 = vmatpush.bf16.xpose.msra.mxu0 0
    %454 = vmatpush.bf16.xpose.msra.mxu0 0
    %455 = vmatpush.bf16.xpose.msra.mxu0 %v446
    %456 = vmatmul.bf16.gmra.mxu0 %v443
    %v457 = vpop.f32.mrf.mxu0
    %v458 = vadd.f32 0.0, %v457
    %v459 = vpop.f32.mrf.mxu0
    %460 = vdwg.mxu0
    %v461 = vsel %vm308, %v325, -inf
    %462 = vmax.xlane.f32.xlu0 %v461
    %v463 = vpop.xlane.xlu0 %462
    %v464 = vsel %vm308, %v344, -inf
    %465 = vmax.xlane.f32.xlu0 %v464
    %v466 = vpop.xlane.xlu0 %465
    %v467 = vsel %vm308, %v363, -inf
    %468 = vmax.xlane.f32.xlu0 %v467
    %v469 = vpop.xlane.xlu0 %468
    %v470 = vsel %vm308, %v382, -inf
    %471 = vmax.xlane.f32.xlu0 %v470
    %v472 = vpop.xlane.xlu0 %471
    %v473 = vsel %vm308, %v401, -inf
    %474 = vmax.xlane.f32.xlu0 %v473
    %v475 = vpop.xlane.xlu0 %474
    %v476 = vsel %vm308, %v420, -inf
    %477 = vmax.xlane.f32.xlu0 %v476
    %v478 = vpop.xlane.xlu0 %477
    %v479 = vsel %vm308, %v439, -inf
    %480 = vmax.xlane.f32.xlu0 %v479
    %v481 = vpop.xlane.xlu0 %480
    %v482 = vsel %vm308, %v458, -inf
    %483 = vmax.xlane.f32.xlu0 %v482
    %v484 = vpop.xlane.xlu0 %483
    %v485 = vsub.f32 %v325, %v463
    %v486 = vsub.f32 %v344, %v466
    %v487 = vsub.f32 %v363, %v469
    %v488 = vsub.f32 %v382, %v472
    %v489 = vsub.f32 %v401, %v475
    %v490 = vsub.f32 %v420, %v478
    %v491 = vsub.f32 %v439, %v481
    %v492 = vsub.f32 %v458, %v484
    %v493 = vmul.f32 %v485, 1.442695
    %v494 = vpow.pop %v493
    %v495 = vmul.f32 %v486, 1.442695
    %v496 = vpow.pop %v495
    %v497 = vmul.f32 %v487, 1.442695
    %v498 = vpow.pop %v497
    %v499 = vmul.f32 %v488, 1.442695
    %v500 = vpow.pop %v499
    %v501 = vmul.f32 %v489, 1.442695
    %v502 = vpow.pop %v501
    %v503 = vmul.f32 %v490, 1.442695
    %v504 = vpow.pop %v503
    %v505 = vmul.f32 %v491, 1.442695
    %v506 = vpow.pop %v505
    %v507 = vmul.f32 %v492, 1.442695
    %v508 = vpow.pop %v507
    %v509 = vsel %vm308, %v494, 0.0
    %510 = vadd.xlane.f32.xlu0 %v509
    %v511 = vpop.xlane.xlu0 %510
    %v512 = vsel %vm308, %v496, 0.0
    %513 = vadd.xlane.f32.xlu0 %v512
    %v514 = vpop.xlane.xlu0 %513
    %v515 = vsel %vm308, %v498, 0.0
    %516 = vadd.xlane.f32.xlu0 %v515
    %v517 = vpop.xlane.xlu0 %516
    %v518 = vsel %vm308, %v500, 0.0
    %519 = vadd.xlane.f32.xlu0 %v518
    %v520 = vpop.xlane.xlu0 %519
    %v521 = vsel %vm308, %v502, 0.0
    %522 = vadd.xlane.f32.xlu0 %v521
    %v523 = vpop.xlane.xlu0 %522
    %v524 = vsel %vm308, %v504, 0.0
    %525 = vadd.xlane.f32.xlu0 %v524
    %v526 = vpop.xlane.xlu0 %525
    %v527 = vsel %vm308, %v506, 0.0
    %528 = vadd.xlane.f32.xlu0 %v527
    %v529 = vpop.xlane.xlu0 %528
    %v530 = vsel %vm308, %v508, 0.0
    %531 = vadd.xlane.f32.xlu0 %v530
    %v532 = vpop.xlane.xlu0 %531
    %v533 = vrcp.pop %v511
    %v534 = vmul.f32 %v511, %v533
    %v535 = vsub.f32 1.0, %v534
    %v536 = vmul.f32 %v533, %v535
    %v537 = vadd.f32 %v533, %v536
    %vm538 = vweird.f32 %v511
    %vm539 = vweird.f32 %v533
    %vm540 = vmor %vm538, %vm539
    %v541 = vsel %vm540, %v533, %v537
    %v542 = vand.u32 2147483647, %v511
    %vm543 = vcmp.eq.f32.partialorder %v542, 8.507059e+37
    %v544 = vand.u32 %v511, 2147483648
    %v545 = vor.u32 1.1754944e-38, %v544
    %v546 = vsel %vm543, %v545, %v541
    %v547 = vmul.f32 %v494, %v546
    %v548 = vrcp.pop %v514
    %v549 = vmul.f32 %v514, %v548
    %v550 = vsub.f32 1.0, %v549
    %v551 = vmul.f32 %v548, %v550
    %v552 = vadd.f32 %v548, %v551
    %vm553 = vweird.f32 %v514
    %vm554 = vweird.f32 %v548
    %vm555 = vmor %vm553, %vm554
    %v556 = vsel %vm555, %v548, %v552
    %v557 = vand.u32 2147483647, %v514
    %vm558 = vcmp.eq.f32.partialorder %v557, 8.507059e+37
    %v559 = vand.u32 %v514, 2147483648
    %v560 = vor.u32 1.1754944e-38, %v559
    %v561 = vsel %vm558, %v560, %v556
    %v562 = vmul.f32 %v496, %v561
    %v563 = vrcp.pop %v517
    %v564 = vmul.f32 %v517, %v563
    %v565 = vsub.f32 1.0, %v564
    %v566 = vmul.f32 %v563, %v565
    %v567 = vadd.f32 %v563, %v566
    %vm568 = vweird.f32 %v517
    %vm569 = vweird.f32 %v563
    %vm570 = vmor %vm568, %vm569
    %v571 = vsel %vm570, %v563, %v567
    %v572 = vand.u32 2147483647, %v517
    %vm573 = vcmp.eq.f32.partialorder %v572, 8.507059e+37
    %v574 = vand.u32 %v517, 2147483648
    %v575 = vor.u32 1.1754944e-38, %v574
    %v576 = vsel %vm573, %v575, %v571
    %v577 = vmul.f32 %v498, %v576
    %v578 = vrcp.pop %v520
    %v579 = vmul.f32 %v520, %v578
    %v580 = vsub.f32 1.0, %v579
    %v581 = vmul.f32 %v578, %v580
    %v582 = vadd.f32 %v578, %v581
    %vm583 = vweird.f32 %v520
    %vm584 = vweird.f32 %v578
    %vm585 = vmor %vm583, %vm584
    %v586 = vsel %vm585, %v578, %v582
    %v587 = vand.u32 2147483647, %v520
    %vm588 = vcmp.eq.f32.partialorder %v587, 8.507059e+37
    %v589 = vand.u32 %v520, 2147483648
    %v590 = vor.u32 1.1754944e-38, %v589
    %v591 = vsel %vm588, %v590, %v586
    %v592 = vmul.f32 %v500, %v591
    %v593 = vrcp.pop %v523
    %v594 = vmul.f32 %v523, %v593
    %v595 = vsub.f32 1.0, %v594
    %v596 = vmul.f32 %v593, %v595
    %v597 = vadd.f32 %v593, %v596
    %vm598 = vweird.f32 %v523
    %vm599 = vweird.f32 %v593
    %vm600 = vmor %vm598, %vm599
    %v601 = vsel %vm600, %v593, %v597
    %v602 = vand.u32 2147483647, %v523
    %vm603 = vcmp.eq.f32.partialorder %v602, 8.507059e+37
    %v604 = vand.u32 %v523, 2147483648
    %v605 = vor.u32 1.1754944e-38, %v604
    %v606 = vsel %vm603, %v605, %v601
    %v607 = vmul.f32 %v502, %v606
    %v608 = vrcp.pop %v526
    %v609 = vmul.f32 %v526, %v608
    %v610 = vsub.f32 1.0, %v609
    %v611 = vmul.f32 %v608, %v610
    %v612 = vadd.f32 %v608, %v611
    %vm613 = vweird.f32 %v526
    %vm614 = vweird.f32 %v608
    %vm615 = vmor %vm613, %vm614
    %v616 = vsel %vm615, %v608, %v612
    %v617 = vand.u32 2147483647, %v526
    %vm618 = vcmp.eq.f32.partialorder %v617, 8.507059e+37
    %v619 = vand.u32 %v526, 2147483648
    %v620 = vor.u32 1.1754944e-38, %v619
    %v621 = vsel %vm618, %v620, %v616
    %v622 = vmul.f32 %v504, %v621
    %v623 = vrcp.pop %v529
    %v624 = vmul.f32 %v529, %v623
    %v625 = vsub.f32 1.0, %v624
    %v626 = vmul.f32 %v623, %v625
    %v627 = vadd.f32 %v623, %v626
    %vm628 = vweird.f32 %v529
    %vm629 = vweird.f32 %v623
    %vm630 = vmor %vm628, %vm629
    %v631 = vsel %vm630, %v623, %v627
    %v632 = vand.u32 2147483647, %v529
    %vm633 = vcmp.eq.f32.partialorder %v632, 8.507059e+37
    %v634 = vand.u32 %v529, 2147483648
    %v635 = vor.u32 1.1754944e-38, %v634
    %v636 = vsel %vm633, %v635, %v631
    %v637 = vmul.f32 %v506, %v636
    %v638 = vrcp.pop %v532
    %v639 = vmul.f32 %v532, %v638
    %v640 = vsub.f32 1.0, %v639
    %v641 = vmul.f32 %v638, %v640
    %v642 = vadd.f32 %v638, %v641
    %vm643 = vweird.f32 %v532
    %vm644 = vweird.f32 %v638
    %vm645 = vmor %vm643, %vm644
    %v646 = vsel %vm645, %v638, %v642
    %v647 = vand.u32 2147483647, %v532
    %vm648 = vcmp.eq.f32.partialorder %v647, 8.507059e+37
    %v649 = vand.u32 %v532, 2147483648
    %v650 = vor.u32 1.1754944e-38, %v649
    %v651 = vsel %vm648, %v650, %v646
    %v652 = vmul.f32 %v508, %v651
    %v653 = vpack.c.bf16 %v547, %v547
    %v654 = vpack.c.bf16 %v562, %v562
    %v655 = vpack.c.bf16 %v577, %v577
    %v656 = vpack.c.bf16 %v592, %v592
    %v657 = vpack.c.bf16 %v607, %v607
    %v658 = vpack.c.bf16 %v622, %v622
    %v659 = vpack.c.bf16 %v637, %v637
    %v660 = vpack.c.bf16 %v652, %v652
    %v662 = vsel %vm308, %v653, 0
    %vm664 = vcmask 1043456
    %v666 = vsel %vm664, %v300, 0
    %668 = vmatpush.bf16.msra.mxu0 0
    %669 = vmatpush.bf16.msra.mxu0 0
    %670 = vmatpush.bf16.msra.mxu0 0
    %671 = vmatpush.bf16.msra.mxu0 0
    %672 = vmatpush.bf16.msra.mxu0 0
    %673 = vmatpush.bf16.msra.mxu0 0
    %674 = vmatpush.bf16.msra.mxu0 0
    %675 = vmatpush.bf16.msra.mxu0 %v666
    %676 = vmatmul.bf16.gmra.mxu0 %v662
    %v677 = vpop.f32.mrf.mxu0
    %v678 = vadd.f32 0.0, %v677
    %v679 = vpop.f32.mrf.mxu0
    %680 = vdwg.mxu0
    %v682 = vsel %vm308, %v654, 0
    %v685 = vsel %vm664, %v301, 0
    %687 = vmatpush.bf16.msra.mxu0 0
    %688 = vmatpush.bf16.msra.mxu0 0
    %689 = vmatpush.bf16.msra.mxu0 0
    %690 = vmatpush.bf16.msra.mxu0 0
    %691 = vmatpush.bf16.msra.mxu0 0
    %692 = vmatpush.bf16.msra.mxu0 0
    %693 = vmatpush.bf16.msra.mxu0 0
    %694 = vmatpush.bf16.msra.mxu0 %v685
    %695 = vmatmul.bf16.gmra.mxu0 %v682
    %v696 = vpop.f32.mrf.mxu0
    %v697 = vadd.f32 0.0, %v696
    %v698 = vpop.f32.mrf.mxu0
    %699 = vdwg.mxu0
    %v701 = vsel %vm308, %v655, 0
    %v704 = vsel %vm664, %v302, 0
    %706 = vmatpush.bf16.msra.mxu0 0
    %707 = vmatpush.bf16.msra.mxu0 0
    %708 = vmatpush.bf16.msra.mxu0 0
    %709 = vmatpush.bf16.msra.mxu0 0
    %710 = vmatpush.bf16.msra.mxu0 0
    %711 = vmatpush.bf16.msra.mxu0 0
    %712 = vmatpush.bf16.msra.mxu0 0
    %713 = vmatpush.bf16.msra.mxu0 %v704
    %714 = vmatmul.bf16.gmra.mxu0 %v701
    %v715 = vpop.f32.mrf.mxu0
    %v716 = vadd.f32 0.0, %v715
    %v717 = vpop.f32.mrf.mxu0
    %718 = vdwg.mxu0
    %v720 = vsel %vm308, %v656, 0
    %v723 = vsel %vm664, %v303, 0
    %725 = vmatpush.bf16.msra.mxu0 0
    %726 = vmatpush.bf16.msra.mxu0 0
    %727 = vmatpush.bf16.msra.mxu0 0
    %728 = vmatpush.bf16.msra.mxu0 0
    %729 = vmatpush.bf16.msra.mxu0 0
    %730 = vmatpush.bf16.msra.mxu0 0
    %731 = vmatpush.bf16.msra.mxu0 0
    %732 = vmatpush.bf16.msra.mxu0 %v723
    %733 = vmatmul.bf16.gmra.mxu0 %v720
    %v734 = vpop.f32.mrf.mxu0
    %v735 = vadd.f32 0.0, %v734
    %v736 = vpop.f32.mrf.mxu0
    %737 = vdwg.mxu0
    %v739 = vsel %vm308, %v657, 0
    %v742 = vsel %vm664, %v304, 0
    %744 = vmatpush.bf16.msra.mxu0 0
    %745 = vmatpush.bf16.msra.mxu0 0
    %746 = vmatpush.bf16.msra.mxu0 0
    %747 = vmatpush.bf16.msra.mxu0 0
    %748 = vmatpush.bf16.msra.mxu0 0
    %749 = vmatpush.bf16.msra.mxu0 0
    %750 = vmatpush.bf16.msra.mxu0 0
    %751 = vmatpush.bf16.msra.mxu0 %v742
    %752 = vmatmul.bf16.gmra.mxu0 %v739
    %v753 = vpop.f32.mrf.mxu0
    %v754 = vadd.f32 0.0, %v753
    %v755 = vpop.f32.mrf.mxu0
    %756 = vdwg.mxu0
    %v758 = vsel %vm308, %v658, 0
    %v761 = vsel %vm664, %v305, 0
    %763 = vmatpush.bf16.msra.mxu0 0
    %764 = vmatpush.bf16.msra.mxu0 0
    %765 = vmatpush.bf16.msra.mxu0 0
    %766 = vmatpush.bf16.msra.mxu0 0
    %767 = vmatpush.bf16.msra.mxu0 0
    %768 = vmatpush.bf16.msra.mxu0 0
    %769 = vmatpush.bf16.msra.mxu0 0
    %770 = vmatpush.bf16.msra.mxu0 %v761
    %771 = vmatmul.bf16.gmra.mxu0 %v758
    %v772 = vpop.f32.mrf.mxu0
    %v773 = vadd.f32 0.0, %v772
    %v774 = vpop.f32.mrf.mxu0
    %775 = vdwg.mxu0
    %v777 = vsel %vm308, %v659, 0
    %v780 = vsel %vm664, %v306, 0
    %782 = vmatpush.bf16.msra.mxu0 0
    %783 = vmatpush.bf16.msra.mxu0 0
    %784 = vmatpush.bf16.msra.mxu0 0
    %785 = vmatpush.bf16.msra.mxu0 0
    %786 = vmatpush.bf16.msra.mxu0 0
    %787 = vmatpush.bf16.msra.mxu0 0
    %788 = vmatpush.bf16.msra.mxu0 0
    %789 = vmatpush.bf16.msra.mxu0 %v780
    %790 = vmatmul.bf16.gmra.mxu0 %v777
    %v791 = vpop.f32.mrf.mxu0
    %v792 = vadd.f32 0.0, %v791
    %v793 = vpop.f32.mrf.mxu0
    %794 = vdwg.mxu0
    %v796 = vsel %vm308, %v660, 0
    %v799 = vsel %vm664, %v307, 0
    %801 = vmatpush.bf16.msra.mxu0 0
    %802 = vmatpush.bf16.msra.mxu0 0
    %803 = vmatpush.bf16.msra.mxu0 0
    %804 = vmatpush.bf16.msra.mxu0 0
    %805 = vmatpush.bf16.msra.mxu0 0
    %806 = vmatpush.bf16.msra.mxu0 0
    %807 = vmatpush.bf16.msra.mxu0 0
    %808 = vmatpush.bf16.msra.mxu0 %v799
    %809 = vmatmul.bf16.gmra.mxu0 %v796
    %v810 = vpop.f32.mrf.mxu0
    %v811 = vadd.f32 0.0, %v810
    %v812 = vpop.f32.mrf.mxu0
    %813 = vdwg.mxu0
    %815 = vrot.lane.b32.xlu0 %v697, 8
    %v816 = vpop.permute.xlu0 %815
    %819 = vrot.lane.b32.xlu0 %v716, 16
    %v820 = vpop.permute.xlu0 %819
    %823 = vrot.lane.b32.xlu0 %v735, 24
    %v824 = vpop.permute.xlu0 %823
    %v826 = vsel %vm308, %v678, %v816
    %vm827 = vcmask 130048
    %v828 = vsel %vm827, %v826, %v820
    %vm829 = vcmask 195584
    %v830 = vsel %vm829, %v828, %v824
    %832 = vrot.lane.b32.xlu0 %v773, 8
    %v833 = vpop.permute.xlu0 %832
    %836 = vrot.lane.b32.xlu0 %v792, 16
    %v837 = vpop.permute.xlu0 %836
    %840 = vrot.lane.b32.xlu0 %v811, 24
    %v841 = vpop.permute.xlu0 %840
    %v843 = vsel %vm308, %v754, %v833
    %v844 = vsel %vm827, %v843, %v837
    %v845 = vsel %vm829, %v844, %v841
    %846 = vst.msk [vmem:[#allocation11] sm:$0xff] %vm135, %v830
    %847 = vst.msk [vmem:[#allocation11 + $0x8] sm:$0xff] %vm135, %v845
    // Predicated region
    $region54: #{tpu_custom_call.1} parent=1 // pred_check
      _
    $region55: #{tpu_custom_call.1} parent=1 // pred_check_branch
      %849 = sbr.rel (0) target = $region57
    $region56: #{tpu_custom_call.1} parent=1 // pred_region
      %851 = vsyncadd [#allocation4], 0
      %s852 = sshll.u32 [#allocation11], 4
      %s853 = int_to_ptr.vmem [resolvable:$true] %s852
      %s854 = sshll.u32 %s8, 4
      %s855 = int_to_ptr.hbm [resolvable:$true] %s854
      %860 = dma.vmem_to_hbm [thread:$0]  %s853, 256, %s855, [#allocation4], 128, 128, 8
    $region57: #{tpu_custom_call.1} parent=1 // pred_fallthru
      _
    // Predicated region
    $region58: #{tpu_custom_call.1} parent=1 // pred_check
      _
    $region59: #{tpu_custom_call.1} parent=1 // pred_check_branch
      %862 = sbr.rel (0) target = $region61
    $region60: #{tpu_custom_call.1} parent=1 // pred_region
      %864 = dma.done [#allocation4], 256
    $region61: #{tpu_custom_call.1} parent=1 // pred_fallthru
      _
    %865 = vsyncpa [#allocation3], 1
    %866 = vsyncpa [#allocation6], 1
    %867 = vsyncpa [#allocation9], 1
    %868 = vsyncpa [#allocation4], 1

</llo_original>
